<compile_context>
chip_gen: v5e
topology: v5e:2x2
jax: 0.10.0
libtpu: 0.0.40
codegen_flags: <defaults>
</compile_context>

<pallas_src>
import functools
import numpy as np

import jax
import jax.numpy as jnp
from jax import lax
from jax.experimental import pallas as pl
from jax.experimental.pallas import tpu as pltpu


# ----------------------------------------------------------------- module parameters
def make_kernel(k):
    """Same as the PyTorch make_kernel: 1-D -> outer product, normalized to sum 1."""
    k = np.asarray(k, np.float32)
    if k.ndim == 1:
        k = np.outer(k, k)
    return k / k.sum()


def _round_up(x, m):
    return (x + m - 1) // m * m


# --------------------------------------------------------------------------- kernel
def _make_blur_plane_kernel(tap_h, tap_v, p0, H, W, Ho, Wo, TB, Wbig, a0):
    """Separable 2-D FIR over a block of TB (H, W) planes.

    x_ref  : (TB, H, W)            input planes (W on lanes)
    o_ref  : (TB, Ho, Wo)          output planes
    xw_ref : (ceil(H/8)*8, Wbig)   zeroed staging buffer (x.dtype); data at [0:H, 0:W],
                                   the trailing zero columns provide the left/right pad
                                   (lane rolls wrap the left pad around)
    t_ref  : (t_rows, Wo) f32      horizontally-filtered rows; data at rows [a0, a0+H),
                                   zero rows before/after provide the top/bottom pad
    """
    tap_h = [float(t) for t in tap_h]
    tap_v = [float(t) for t in tap_v]
    kw, kh = len(tap_h), len(tap_v)
    H8 = _round_up(H, 8)
    n_hchunks = H8 // 8
    n_ochunks = -(-Ho // 8)
    base = a0 - p0                               # t_ref row of padded row 0 (>= 0)
    h_shift = [(p0 - kx) % Wbig for kx in range(kw)]   # static lane-roll amounts

    def kernel(x_ref, o_ref, xw_ref, t_ref):
        # Zero the scratch every invocation (cheap, amortized over TB planes); the
        # zero regions are what implements the upfirdn2d zero padding.
        xw_ref[...] = jnp.zeros_like(xw_ref)
        t_ref[...] = jnp.zeros_like(t_ref)

        @pl.loop(0, TB)
        def _plane(b):
            # Stage the plane at the aligned top-left corner of the zeroed buffer.
            xw_ref[0:H, 0:W] = x_ref[b]

            # ---- horizontal pass: 4-tap FIR via lane rolls (XLU), 8 rows at a time.
            for c in range(n_hchunks):
                r0 = 8 * c
                rows = xw_ref[pl.ds(r0, 8), :].astype(jnp.float32)      # (8, Wbig)
                acc = None
                for kx in range(kw):
                    sh = h_shift[kx]
                    shifted = rows if sh == 0 else pltpu.roll(rows, shift=sh, axis=1)
                    term = tap_h[kx] * shifted[:, :Wo]
                    acc = term if acc is None else acc + term
                t_ref[pl.ds(a0 + r0, 8)] = acc                          # aligned store

            # ---- vertical pass: 4-tap FIR over sublanes of the f32 intermediate.
            for c in range(n_ochunks):
                o0 = 8 * c
                nrows = min(8, Ho - o0)
                acc = tap_v[0] * t_ref[pl.ds(base + o0, 8)]
                for ky in range(1, kh):
                    acc = acc + tap_v[ky] * t_ref[pl.ds(base + o0 + ky, 8)]
                o_ref[b, pl.ds(o0, nrows), :] = acc[:nrows].astype(o_ref.dtype)

    return kernel


# ----------------------------------------------------------------- pallas_call glue
def blur(x, kernel=(1, 3, 3, 1), pad=(2, 2), upsample_factor=1,
         vmem_budget_bytes=28 * 2**20):
    """Blur.forward: NCHW in / NCHW out, matching the PyTorch module."""
    k = np.asarray(kernel, np.float32)
    assert k.ndim == 1, "Pallas blur expects the 1-D separable kernel spec the module uses"
    kn = k / k.sum()
    kh = kw = int(kn.shape[0])
    # upfirdn2d correlates with the flipped kernel; flip each separable factor
    # (identity for the symmetric [1,3,3,1] the discriminator uses).
    tap_h = kn[::-1].tolist()
    tap_v = (kn[::-1] * float(upsample_factor) ** 2).tolist()

    N, C, H, W = x.shape
    p0, p1 = pad
    Wo = W + p0 + p1 - kw + 1
    Ho = H + p0 + p1 - kh + 1
    assert Ho > 0 and Wo > 0

    B = N * C
    a0 = _round_up(p0, 8)                        # aligned row where plane data starts in t
    H8 = _round_up(H, 8)
    n_ochunks = -(-Ho // 8)
    t_rows = _round_up(max(a0 - p0 + 8 * n_ochunks + kh - 1, a0 + H8), 8)
    Wbig = _round_up(W + p0 + p1, 128)           # staging width (multiple of 128 lanes)

    # --- tile sizing from padded geometry (lane/sublane padding included) ----------
    itemsize = jnp.dtype(x.dtype).itemsize
    lanes_w = _round_up(W, 128)
    lanes_wo = _round_up(Wo, 128)
    fixed = H8 * Wbig * itemsize + t_rows * lanes_wo * 4                 # scratches (single)
    per_plane = 2 * (H8 * lanes_w * itemsize + _round_up(Ho, 8) * lanes_wo * itemsize)
    tb_fit = max(1, int((vmem_budget_bytes - fixed) // max(per_plane, 1)))
    cap = max(1, min(tb_fit, 256, max(1, B // 2)))       # >=2 grid steps when B >= 2
    TB = 1
    for d in range(1, cap + 1):                          # largest divisor of B <= cap
        if B % d == 0:
            TB = d
    vmem_limit = int(min(100 * 2**20, max(8 * 2**20, fixed + TB * per_plane + 2 * 2**20)))

    xb = x.reshape(B, H, W)                              # free reshape, stays NCHW order
    kern = _make_blur_plane_kernel(tap_h, tap_v, p0, H, W, Ho, Wo, TB, Wbig, a0)
    out = pl.pallas_call(
        kern,
        out_shape=jax.ShapeDtypeStruct((B, Ho, Wo), x.dtype),
        grid=(B // TB,),
        in_specs=[pl.BlockSpec((TB, H, W), lambda i: (i, 0, 0))],
        out_specs=pl.BlockSpec((TB, Ho, Wo), lambda i: (i, 0, 0)),
        scratch_shapes=[pltpu.VMEM((H8, Wbig), x.dtype),
                        pltpu.VMEM((t_rows, Wo), jnp.float32)],
        compiler_params=pltpu.CompilerParams(
            dimension_semantics=("parallel",),
            vmem_limit_bytes=vmem_limit,
        ),
    )(xb)
    return out.reshape(N, C, Ho, Wo)

# TODO(synk): very large single planes (e.g. > ~2k x 2k f32) would need an additional
# row-tiling level inside the plane; eg3d resolutions (<= 512) always fit one plane in VMEM.


# ----------------------------------------------------------------- pure-JAX reference
def _ref_blur(x_nchw, kernel=(1, 3, 3, 1), pad=(2, 2), upsample_factor=1):
    k2 = make_kernel(kernel) * float(upsample_factor) ** 2
    w = jnp.asarray(np.ascontiguousarray(k2[::-1, ::-1]))    # upfirdn2d flips the kernel
    x = jnp.transpose(x_nchw, (0, 2, 3, 1))
    C = x.shape[-1]
    kdw = jnp.tile(w[:, :, None, None], (1, 1, 1, C))
    p0, p1 = pad
    y = lax.conv_general_dilated(x, kdw, (1, 1), ((p0, p1), (p0, p1)),
                                 feature_group_count=C,
                                 dimension_numbers=("NHWC", "HWIO", "NHWC"))
    return jnp.transpose(y, (0, 3, 1, 2))


# ------------------------------------------------------------------------------ main
if __name__ == "__main__":
    key = jax.random.PRNGKey(0)

    configs = [
        # conv-path blur in the eg3d ResBlock (toy size)
        dict(shape=(2, 4, 16, 16), pad=(2, 2), upsample_factor=1),
        # skip-path blur
        dict(shape=(2, 4, 16, 16), pad=(1, 1), upsample_factor=1),
        # larger, non-square, upsample_factor scaling, multi-plane blocks
        dict(shape=(2, 8, 40, 36), pad=(2, 2), upsample_factor=2),
        # H/W not multiples of 8, B=3 -> exercises masked row tails and TB=1 path
        dict(shape=(1, 3, 21, 19), pad=(2, 2), upsample_factor=1),
    ]

    for i, cfg in enumerate(configs):
        key, sub = jax.random.split(key)
        x = jax.random.normal(sub, cfg["shape"], jnp.float32)
        fn = jax.jit(functools.partial(blur, pad=cfg["pad"],
                                       upsample_factor=cfg["upsample_factor"]))
        out = jax.block_until_ready(fn(x))
        ref = _ref_blur(x, pad=cfg["pad"], upsample_factor=cfg["upsample_factor"])
        assert out.shape == ref.shape, (i, out.shape, ref.shape)
        err = float(jnp.max(jnp.abs(out - ref)))
        assert jnp.allclose(out, ref, atol=1e-5, rtol=1e-5), (i, err)

    print("KERNEL_OK")
</pallas_src>

<mosaic_0001>
module attributes {stable_mosaic.version = 11 : i64} {
  func.func @kernel(%arg0: i32, %arg1: memref<4x16x16xf32, #tpu.memory_space<vmem>>, %arg2: memref<4x17x17xf32, #tpu.memory_space<vmem>>, %arg3: memref<16x128xf32, #tpu.memory_space<vmem>>, %arg4: memref<40x17xf32, #tpu.memory_space<vmem>>) attributes {dimension_semantics = [#tpu.dimension_semantics<parallel>], iteration_bounds = array<i64: 2>, scalar_prefetch = 0 : i64, scratch_operands = 2 : i64, tpu.core_type = #tpu.core_type<tc>, window_params = [{transform_indices = @transform_0, window_bounds = array<i64: 4, 16, 16>}, {transform_indices = @transform_1, window_bounds = array<i64: 4, 17, 17>}]} {
    %cst = arith.constant 0.000000e+00 : f32
    %0 = vector.broadcast %cst : f32 to vector<16x128xf32>
    %c0 = arith.constant 0 : index
    %c0_0 = arith.constant 0 : index
    %1 = vector.load %arg3[%c0, %c0_0] : memref<16x128xf32, #tpu.memory_space<vmem>>, vector<16x128xf32>
    tpu.vector_store %arg3[%c0, %c0_0], %0 {strides = array<i32>} : memref<16x128xf32, #tpu.memory_space<vmem>>, vector<16x128xf32>,
    %cst_1 = arith.constant 0.000000e+00 : f32
    %2 = vector.broadcast %cst_1 : f32 to vector<40x17xf32>
    %c0_2 = arith.constant 0 : index
    %c0_3 = arith.constant 0 : index
    %3 = vector.load %arg4[%c0_2, %c0_3] : memref<40x17xf32, #tpu.memory_space<vmem>>, vector<40x17xf32>
    tpu.vector_store %arg4[%c0_2, %c0_3], %2 {strides = array<i32>} : memref<40x17xf32, #tpu.memory_space<vmem>>, vector<40x17xf32>,
    %c0_i32 = arith.constant 0 : i32
    %c4_i32 = arith.constant 4 : i32
    %4 = arith.addi %c0_i32, %c4_i32 : i32
    %c1_i32 = arith.constant 1 : i32
    scf.for %arg5 = %c0_i32 to %4 step %c1_i32  : i32 {
      %c1_i32_5 = arith.constant 1 : i32
      %5 = arith.muli %arg5, %c1_i32_5 : i32
      %c0_i32_6 = arith.constant 0 : i32
      %6 = arith.addi %c0_i32_6, %5 : i32
      %7 = arith.index_cast %6 : i32 to index
      %c0_7 = arith.constant 0 : index
      %c0_8 = arith.constant 0 : index
      %8 = vector.load %arg1[%7, %c0_7, %c0_8] : memref<4x16x16xf32, #tpu.memory_space<vmem>>, vector<1x16x16xf32>
      %9 = vector.shape_cast %8 : vector<1x16x16xf32> to vector<16x16xf32>
      %c0_9 = arith.constant 0 : index
      %c0_10 = arith.constant 0 : index
      %10 = vector.load %arg3[%c0_9, %c0_10] : memref<16x128xf32, #tpu.memory_space<vmem>>, vector<16x16xf32>
      tpu.vector_store %arg3[%c0_9, %c0_10], %9 {strides = array<i32>} : memref<16x128xf32, #tpu.memory_space<vmem>>, vector<16x16xf32>,
      %c0_11 = arith.constant 0 : index
      %c0_12 = arith.constant 0 : index
      %11 = vector.load %arg3[%c0_11, %c0_12] : memref<16x128xf32, #tpu.memory_space<vmem>>, vector<8x128xf32>
      %c2_i32 = arith.constant 2 : i32
      %12 = tpu.dynamic_rotate %11 by %c2_i32 dim 1 : vector<8x128xf32>, i32 -> vector<8x128xf32>
      %13 = vector.extract_strided_slice %12 {offsets = [0, 0], sizes = [8, 17], strides = [1, 1]} : vector<8x128xf32> to vector<8x17xf32>
      %cst_13 = arith.constant 1.250000e-01 : f32
      %14 = vector.broadcast %cst_13 : f32 to vector<8x17xf32>
      %15 = arith.mulf %14, %13 : vector<8x17xf32>
      %c1_i32_14 = arith.constant 1 : i32
      %16 = tpu.dynamic_rotate %11 by %c1_i32_14 dim 1 : vector<8x128xf32>, i32 -> vector<8x128xf32>
      %17 = vector.extract_strided_slice %16 {offsets = [0, 0], sizes = [8, 17], strides = [1, 1]} : vector<8x128xf32> to vector<8x17xf32>
      %cst_15 = arith.constant 3.750000e-01 : f32
      %18 = vector.broadcast %cst_15 : f32 to vector<8x17xf32>
      %19 = arith.mulf %18, %17 : vector<8x17xf32>
      %20 = arith.addf %15, %19 : vector<8x17xf32>
      %21 = vector.extract_strided_slice %11 {offsets = [0, 0], sizes = [8, 17], strides = [1, 1]} : vector<8x128xf32> to vector<8x17xf32>
      %cst_16 = arith.constant 3.750000e-01 : f32
      %22 = vector.broadcast %cst_16 : f32 to vector<8x17xf32>
      %23 = arith.mulf %22, %21 : vector<8x17xf32>
      %24 = arith.addf %20, %23 : vector<8x17xf32>
      %c127_i32 = arith.constant 127 : i32
      %25 = tpu.dynamic_rotate %11 by %c127_i32 dim 1 : vector<8x128xf32>, i32 -> vector<8x128xf32>
      %26 = vector.extract_strided_slice %25 {offsets = [0, 0], sizes = [8, 17], strides = [1, 1]} : vector<8x128xf32> to vector<8x17xf32>
      %cst_17 = arith.constant 1.250000e-01 : f32
      %27 = vector.broadcast %cst_17 : f32 to vector<8x17xf32>
      %28 = arith.mulf %27, %26 : vector<8x17xf32>
      %29 = arith.addf %24, %28 : vector<8x17xf32>
      %c8 = arith.constant 8 : index
      %c0_18 = arith.constant 0 : index
      %30 = vector.load %arg4[%c8, %c0_18] : memref<40x17xf32, #tpu.memory_space<vmem>>, vector<8x17xf32>
      tpu.vector_store %arg4[%c8, %c0_18], %29 {strides = array<i32>} : memref<40x17xf32, #tpu.memory_space<vmem>>, vector<8x17xf32>,
      %c8_19 = arith.constant 8 : index
      %c0_20 = arith.constant 0 : index
      %31 = vector.load %arg3[%c8_19, %c0_20] : memref<16x128xf32, #tpu.memory_space<vmem>>, vector<8x128xf32>
      %c2_i32_21 = arith.constant 2 : i32
      %32 = tpu.dynamic_rotate %31 by %c2_i32_21 dim 1 : vector<8x128xf32>, i32 -> vector<8x128xf32>
      %33 = vector.extract_strided_slice %32 {offsets = [0, 0], sizes = [8, 17], strides = [1, 1]} : vector<8x128xf32> to vector<8x17xf32>
      %cst_22 = arith.constant 1.250000e-01 : f32
      %34 = vector.broadcast %cst_22 : f32 to vector<8x17xf32>
      %35 = arith.mulf %34, %33 : vector<8x17xf32>
      %c1_i32_23 = arith.constant 1 : i32
      %36 = tpu.dynamic_rotate %31 by %c1_i32_23 dim 1 : vector<8x128xf32>, i32 -> vector<8x128xf32>
      %37 = vector.extract_strided_slice %36 {offsets = [0, 0], sizes = [8, 17], strides = [1, 1]} : vector<8x128xf32> to vector<8x17xf32>
      %cst_24 = arith.constant 3.750000e-01 : f32
      %38 = vector.broadcast %cst_24 : f32 to vector<8x17xf32>
      %39 = arith.mulf %38, %37 : vector<8x17xf32>
      %40 = arith.addf %35, %39 : vector<8x17xf32>
      %41 = vector.extract_strided_slice %31 {offsets = [0, 0], sizes = [8, 17], strides = [1, 1]} : vector<8x128xf32> to vector<8x17xf32>
      %cst_25 = arith.constant 3.750000e-01 : f32
      %42 = vector.broadcast %cst_25 : f32 to vector<8x17xf32>
      %43 = arith.mulf %42, %41 : vector<8x17xf32>
      %44 = arith.addf %40, %43 : vector<8x17xf32>
      %c127_i32_26 = arith.constant 127 : i32
      %45 = tpu.dynamic_rotate %31 by %c127_i32_26 dim 1 : vector<8x128xf32>, i32 -> vector<8x128xf32>
      %46 = vector.extract_strided_slice %45 {offsets = [0, 0], sizes = [8, 17], strides = [1, 1]} : vector<8x128xf32> to vector<8x17xf32>
      %cst_27 = arith.constant 1.250000e-01 : f32
      %47 = vector.broadcast %cst_27 : f32 to vector<8x17xf32>
      %48 = arith.mulf %47, %46 : vector<8x17xf32>
      %49 = arith.addf %44, %48 : vector<8x17xf32>
      %c16 = arith.constant 16 : index
      %c0_28 = arith.constant 0 : index
      %50 = vector.load %arg4[%c16, %c0_28] : memref<40x17xf32, #tpu.memory_space<vmem>>, vector<8x17xf32>
      tpu.vector_store %arg4[%c16, %c0_28], %49 {strides = array<i32>} : memref<40x17xf32, #tpu.memory_space<vmem>>, vector<8x17xf32>,
      %c6 = arith.constant 6 : index
      %c0_29 = arith.constant 0 : index
      %51 = vector.load %arg4[%c6, %c0_29] : memref<40x17xf32, #tpu.memory_space<vmem>>, vector<8x17xf32>
      %cst_30 = arith.constant 1.250000e-01 : f32
      %52 = vector.broadcast %cst_30 : f32 to vector<8x17xf32>
      %53 = arith.mulf %52, %51 : vector<8x17xf32>
      %c7 = arith.constant 7 : index
      %c0_31 = arith.constant 0 : index
      %54 = vector.load %arg4[%c7, %c0_31] : memref<40x17xf32, #tpu.memory_space<vmem>>, vector<8x17xf32>
      %cst_32 = arith.constant 3.750000e-01 : f32
      %55 = vector.broadcast %cst_32 : f32 to vector<8x17xf32>
      %56 = arith.mulf %55, %54 : vector<8x17xf32>
      %57 = arith.addf %53, %56 : vector<8x17xf32>
      %c8_33 = arith.constant 8 : index
      %c0_34 = arith.constant 0 : index
      %58 = vector.load %arg4[%c8_33, %c0_34] : memref<40x17xf32, #tpu.memory_space<vmem>>, vector<8x17xf32>
      %cst_35 = arith.constant 3.750000e-01 : f32
      %59 = vector.broadcast %cst_35 : f32 to vector<8x17xf32>
      %60 = arith.mulf %59, %58 : vector<8x17xf32>
      %61 = arith.addf %57, %60 : vector<8x17xf32>
      %c9 = arith.constant 9 : index
      %c0_36 = arith.constant 0 : index
      %62 = vector.load %arg4[%c9, %c0_36] : memref<40x17xf32, #tpu.memory_space<vmem>>, vector<8x17xf32>
      %cst_37 = arith.constant 1.250000e-01 : f32
      %63 = vector.broadcast %cst_37 : f32 to vector<8x17xf32>
      %64 = arith.mulf %63, %62 : vector<8x17xf32>
      %65 = arith.addf %61, %64 : vector<8x17xf32>
      %66 = arith.index_cast %6 : i32 to index
      %c0_38 = arith.constant 0 : index
      %c0_39 = arith.constant 0 : index
      %67 = vector.load %arg2[%66, %c0_38, %c0_39] : memref<4x17x17xf32, #tpu.memory_space<vmem>>, vector<1x8x17xf32>
      %68 = vector.shape_cast %67 : vector<1x8x17xf32> to vector<8x17xf32>
      %69 = vector.shape_cast %65 : vector<8x17xf32> to vector<1x8x17xf32>
      tpu.vector_store %arg2[%66, %c0_38, %c0_39], %69 {strides = array<i32>} : memref<4x17x17xf32, #tpu.memory_space<vmem>>, vector<1x8x17xf32>,
      %c14 = arith.constant 14 : index
      %c0_40 = arith.constant 0 : index
      %70 = vector.load %arg4[%c14, %c0_40] : memref<40x17xf32, #tpu.memory_space<vmem>>, vector<8x17xf32>
      %cst_41 = arith.constant 1.250000e-01 : f32
      %71 = vector.broadcast %cst_41 : f32 to vector<8x17xf32>
      %72 = arith.mulf %71, %70 : vector<8x17xf32>
      %c15 = arith.constant 15 : index
      %c0_42 = arith.constant 0 : index
      %73 = vector.load %arg4[%c15, %c0_42] : memref<40x17xf32, #tpu.memory_space<vmem>>, vector<8x17xf32>
      %cst_43 = arith.constant 3.750000e-01 : f32
      %74 = vector.broadcast %cst_43 : f32 to vector<8x17xf32>
      %75 = arith.mulf %74, %73 : vector<8x17xf32>
      %76 = arith.addf %72, %75 : vector<8x17xf32>
      %c16_44 = arith.constant 16 : index
      %c0_45 = arith.constant 0 : index
      %77 = vector.load %arg4[%c16_44, %c0_45] : memref<40x17xf32, #tpu.memory_space<vmem>>, vector<8x17xf32>
      %cst_46 = arith.constant 3.750000e-01 : f32
      %78 = vector.broadcast %cst_46 : f32 to vector<8x17xf32>
      %79 = arith.mulf %78, %77 : vector<8x17xf32>
      %80 = arith.addf %76, %79 : vector<8x17xf32>
      %c17 = arith.constant 17 : index
      %c0_47 = arith.constant 0 : index
      %81 = vector.load %arg4[%c17, %c0_47] : memref<40x17xf32, #tpu.memory_space<vmem>>, vector<8x17xf32>
      %cst_48 = arith.constant 1.250000e-01 : f32
      %82 = vector.broadcast %cst_48 : f32 to vector<8x17xf32>
      %83 = arith.mulf %82, %81 : vector<8x17xf32>
      %84 = arith.addf %80, %83 : vector<8x17xf32>
      %85 = arith.index_cast %6 : i32 to index
      %c8_49 = arith.constant 8 : index
      %c0_50 = arith.constant 0 : index
      %86 = vector.load %arg2[%85, %c8_49, %c0_50] : memref<4x17x17xf32, #tpu.memory_space<vmem>>, vector<1x8x17xf32>
      %87 = vector.shape_cast %86 : vector<1x8x17xf32> to vector<8x17xf32>
      %88 = vector.shape_cast %84 : vector<8x17xf32> to vector<1x8x17xf32>
      tpu.vector_store %arg2[%85, %c8_49, %c0_50], %88 {strides = array<i32>} : memref<4x17x17xf32, #tpu.memory_space<vmem>>, vector<1x8x17xf32>,
      %c22 = arith.constant 22 : index
      %c0_51 = arith.constant 0 : index
      %89 = vector.load %arg4[%c22, %c0_51] : memref<40x17xf32, #tpu.memory_space<vmem>>, vector<8x17xf32>
      %cst_52 = arith.constant 1.250000e-01 : f32
      %90 = vector.broadcast %cst_52 : f32 to vector<8x17xf32>
      %91 = arith.mulf %90, %89 : vector<8x17xf32>
      %c23 = arith.constant 23 : index
      %c0_53 = arith.constant 0 : index
      %92 = vector.load %arg4[%c23, %c0_53] : memref<40x17xf32, #tpu.memory_space<vmem>>, vector<8x17xf32>
      %cst_54 = arith.constant 3.750000e-01 : f32
      %93 = vector.broadcast %cst_54 : f32 to vector<8x17xf32>
      %94 = arith.mulf %93, %92 : vector<8x17xf32>
      %95 = arith.addf %91, %94 : vector<8x17xf32>
      %c24 = arith.constant 24 : index
      %c0_55 = arith.constant 0 : index
      %96 = vector.load %arg4[%c24, %c0_55] : memref<40x17xf32, #tpu.memory_space<vmem>>, vector<8x17xf32>
      %cst_56 = arith.constant 3.750000e-01 : f32
      %97 = vector.broadcast %cst_56 : f32 to vector<8x17xf32>
      %98 = arith.mulf %97, %96 : vector<8x17xf32>
      %99 = arith.addf %95, %98 : vector<8x17xf32>
      %c25 = arith.constant 25 : index
      %c0_57 = arith.constant 0 : index
      %100 = vector.load %arg4[%c25, %c0_57] : memref<40x17xf32, #tpu.memory_space<vmem>>, vector<8x17xf32>
      %cst_58 = arith.constant 1.250000e-01 : f32
      %101 = vector.broadcast %cst_58 : f32 to vector<8x17xf32>
      %102 = arith.mulf %101, %100 : vector<8x17xf32>
      %103 = arith.addf %99, %102 : vector<8x17xf32>
      %104 = vector.extract_strided_slice %103 {offsets = [0, 0], sizes = [1, 17], strides = [1, 1]} : vector<8x17xf32> to vector<1x17xf32>
      %105 = arith.index_cast %6 : i32 to index
      %c16_59 = arith.constant 16 : index
      %c0_60 = arith.constant 0 : index
      %106 = vector.load %arg2[%105, %c16_59, %c0_60] : memref<4x17x17xf32, #tpu.memory_space<vmem>>, vector<1x1x17xf32>
      %107 = vector.shape_cast %106 : vector<1x1x17xf32> to vector<1x17xf32>
      %108 = vector.shape_cast %104 : vector<1x17xf32> to vector<1x1x17xf32>
      tpu.vector_store %arg2[%105, %c16_59, %c0_60], %108 {strides = array<i32>} : memref<4x17x17xf32, #tpu.memory_space<vmem>>, vector<1x1x17xf32>,
    }
    %c4_i32_4 = arith.constant 4 : i32
    return
  }
  func.func @transform_0(%arg0: i32) -> (i32, i32, i32) {
    %c0_i32 = arith.constant 0 : i32
    %c0_i32_0 = arith.constant 0 : i32
    %c0_i32_1 = arith.constant 0 : i32
    return %arg0, %c0_i32, %c0_i32_0 : i32, i32, i32
  }
  func.func @transform_1(%arg0: i32) -> (i32, i32, i32) {
    %c0_i32 = arith.constant 0 : i32
    %c0_i32_0 = arith.constant 0 : i32
    %c0_i32_1 = arith.constant 0 : i32
    return %arg0, %c0_i32, %c0_i32_0 : i32, i32, i32
  }
}

</mosaic_0001>

<llo_original>
// kernel: blur.1
$region0: #{blur.1}
  #allocation0 [shape = 'u32[]', space=smem, size = 0x4, offset = 0x4, fixed_abs, tag = 'smem constant byte address 0x4 - core index']
  #allocation1 [shape = 'u32[72,128]{1,0:T(1,128)}', space=vmem, size = 0x9000, scoped, tag = 'internal scratch']
  #allocation2 [shape = 'f32[16,128]{1,0:T(8,128)}', space=vmem, size = 0x2000, scoped, tag = 'scratch operand']
  #allocation3 [shape = 'f32[40,17]{1,0:T(8,128)}', space=vmem, size = 0x5000, scoped, tag = 'scratch operand']
  %s0 = inlined_call_operand.hbm [shape: f32[8,16,16], index: 0, kind: input, shape index: {}]
  %s1 = inlined_call_operand.vmem [shape: f32[8,17,17], index: 1, kind: output, shape index: {}]
  %s2 = sld [smem:[#allocation0]]
  $region48: #{blur.1} parent=0
    _
  %s4 = ssub.s32 1, %s2
  %s5 = scalar_select 0, %s4, %s2
  $region1: #{blur.1} parent=0
    #allocation4 [shape = 'u8[65536]{0}', space=vmem, size = 0x10000, scoped, tag = 'input window, operand 0']
    #allocation5 [shape = 's32[2]{0}', space=sflag, size = 0x8, scoped, tag = 'scoped memory for blur.1']
    %6 = vsyncpa [#allocation5], 0
    %s7 = scalar_lea.sflag [#allocation5], 1
    %8 = vsyncpa %s7, 0
    loop: start=0, step=1, limit=4
    $region2: #{blur.1} parent=1 // loop_pre_header
      _
    $region3: #{blur.1} parent=1 // loop_header
      %s10 = sphi 0, %s14
      %p11 = scmp.ge.s32.totalorder %s10, 4
      %s20 = sphi 0, %s22
      %s23 = sphi 0, %s20
      %s24 = sphi 0, %s23
      %s40 = sphi 0, %s24
      %s46 = sphi 0, %s48
      %s49 = sphi 0, %s46
      %s50 = sphi 0, %s49
      %s66 = sphi 0, %s50
    $region4: #{blur.1} parent=1 // loop_header_branch
      %13 = sbr.rel (%p11) target = $region8
    $region5: #{blur.1} parent=1 // loop_body
      %s15 = ssub.s32 %s10, 1
      %s16 = ssub.s32 %s10, 2
      %s17 = sadd.s32 %s10, 1
      %s18 = ssub.s32 %s10, %s17
      %p19 = scmp.eq.s32.totalorder %s18, 0
      %s21 = sadd.s32 %s20, 1
      %s22 = scalar_select %p19, %s20, %s21
      %p25 = pneg %p19
      %p26 = scmp.eq.s32.totalorder %s10, 1
      %p27 = por %p25, %p26
      %p28 = scmp.ne.s32.totalorder %s20, %s23
      %p29 = scmp.eq.s32.totalorder %s10, 0
      %p30 = por %p28, %p29
      %p31 = scmp.ne.s32.totalorder %s20, %s23
      %p32 = scmp.eq.s32.totalorder %s15, 1
      %p33 = por %p31, %p32
      %p34 = scmp.ne.s32.totalorder %s23, %s24
      %p35 = scmp.eq.s32.totalorder %s15, 0
      %p36 = por %p34, %p35
      %p37 = scmp.ne.s32.totalorder %s23, %s24
      %p38 = scmp.eq.s32.totalorder %s16, 1
      %p39 = por %p37, %p38
      %p41 = scmp.ne.s32.totalorder %s24, %s40
      %p42 = scmp.eq.s32.totalorder %s16, 0
      %p43 = por %p41, %p42
      %s44 = ssub.s32 %s10, %s17
      %p45 = scmp.eq.s32.totalorder %s44, 0
      %s47 = sadd.s32 %s46, 1
      %s48 = scalar_select %p45, %s46, %s47
      %p51 = pneg %p45
      %p52 = scmp.eq.s32.totalorder %s10, 1
      %p53 = por %p51, %p52
      %p54 = scmp.ne.s32.totalorder %s46, %s49
      %p55 = scmp.eq.s32.totalorder %s10, 0
      %p56 = por %p54, %p55
      %p57 = scmp.ne.s32.totalorder %s46, %s49
      %p58 = scmp.eq.s32.totalorder %s15, 1
      %p59 = por %p57, %p58
      %p60 = scmp.ne.s32.totalorder %s49, %s50
      %p61 = scmp.eq.s32.totalorder %s15, 0
      %p62 = por %p60, %p61
      %p63 = scmp.ne.s32.totalorder %s49, %s50
      %p64 = scmp.eq.s32.totalorder %s16, 1
      %p65 = por %p63, %p64
      %p67 = scmp.ne.s32.totalorder %s50, %s66
      %p68 = scmp.eq.s32.totalorder %s16, 0
      %p69 = por %p67, %p68
      %p70 = scmp.le.s32.totalorder 1, %s10
      %p71 = scmp.lt.s32.totalorder %s10, 3
      %p72 = pnand %p70, %p71
      %p73 = pneg %p72
      // Predicated region
      $region9: #{blur.1} parent=5 // pred_check
        _
      $region10: #{blur.1} parent=5 // pred_check_branch
        %75 = sbr.rel (%p72) target = $region12
      $region11: #{blur.1} parent=5 // pred_region
        %s76 = ssub.s32 %s10, 1
      $region12: #{blur.1} parent=5 // pred_fallthru
        _
      %p77 = scmp.lt.s32.totalorder %s10, 2
      // Predicated region
      $region13: #{blur.1} parent=5 // pred_check
        %p78 = pneg %p77
      $region14: #{blur.1} parent=5 // pred_check_branch
        %80 = sbr.rel (%p78) target = $region16
      $region15: #{blur.1} parent=5 // pred_region
        // Predicated region
        $region17: #{blur.1} parent=15 // pred_check
          %p81 = pneg %p30
        $region18: #{blur.1} parent=15 // pred_check_branch
          %83 = sbr.rel (%p81) target = $region20
        $region19: #{blur.1} parent=15 // pred_region
          %s84 = sand.u32 %s20, 1
          %s85 = scalar_lea.sflag [#allocation5], %s84
          %s86 = sand.u32 %s20, 1
          %s87 = smul.addr %s86, 64
          %s88 = scalar_lea.vmem [#allocation4], %s87
          %s89 = smul.u32 4, %s10
          %91 = vsyncadd %s85, 0
          %s92 = smul.addr %s89, 2
          %s93 = smul.addr %s92, 8
          %s94 = scalar_lea.hbm %s0, %s93
          %s95 = sshll.u32 %s94, 4
          %s96 = int_to_ptr.hbm [resolvable:$true] %s95
          %s97 = sshll.u32 %s88, 4
          %s98 = int_to_ptr.vmem [resolvable:$true] %s97
          %103 = dma.hbm_to_vmem [thread:$0]  %s96, 1024, %s98, %s85, 128, 128, 8
        $region20: #{blur.1} parent=15 // pred_fallthru
          _
      $region16: #{blur.1} parent=5 // pred_fallthru
        _
      %p104 = scmp.le.s32.totalorder 1, %s10
      %p105 = scmp.lt.s32.totalorder %s10, 3
      %p106 = pnand %p104, %p105
      %p107 = pneg %p106
      // Predicated region
      $region21: #{blur.1} parent=5 // pred_check
        _
      $region22: #{blur.1} parent=5 // pred_check_branch
        %109 = sbr.rel (%p106) target = $region24
      $region23: #{blur.1} parent=5 // pred_region
        %s110 = ssub.s32 %s10, 1
        %s111 = sand.u32 %s23, 1
        %s112 = scalar_lea.sflag [#allocation5], %s111
        %s113 = sand.u32 %s23, 1
        %s114 = smul.addr %s113, 64
        %s115 = scalar_lea.vmem [#allocation4], %s114
        // Predicated region
        $region25: #{blur.1} parent=23 // pred_check
          %p116 = pneg %p36
        $region26: #{blur.1} parent=23 // pred_check_branch
          %118 = sbr.rel (%p116) target = $region28
        $region27: #{blur.1} parent=23 // pred_region
          %120 = dma.done %s112, 1024
        $region28: #{blur.1} parent=23 // pred_fallthru
          _
        %s121 = sand.u32 %s23, 1
        %s122 = scalar_lea.sflag [#allocation5], %s121
        %s123 = sand.u32 %s23, 1
        %s124 = smul.addr %s123, 64
        %s125 = scalar_lea.vmem [#allocation4], %s124
        %p126 = pneg %p36
        %p127 = pneg %p33
        %p128 = pneg %p62
        %p129 = pneg %p59
        %s130 = smul.u32 4, %s15
        %p131 = scmp.lt.s32.totalorder %s130, 7
        %s132 = scalar_select %p131, %s130, 7
        %s133 = smul.addr %s132, 3
        %s134 = smul.addr %s133, 8
        %s135 = scalar_lea.vmem %s1, %s134
        %s136 = smul.u32 4, %s15
        %s137 = smul.u32 4, %s15
        %p138 = scmp.lt.s32.totalorder %s137, 7
        %s139 = scalar_select %p138, %s137, 7
        %s140 = smul.addr %s139, 3
        %s141 = smul.addr %s140, 8
        %s142 = scalar_lea.vmem %s1, %s141
        %s143 = smul.u32 4, %s15
        %144 = vst [vmem:[#allocation2] sm:$0xff] 0.0
        %145 = vst [vmem:[#allocation2 + $0x8] sm:$0xff] 0.0
        %vm146 = vcmask 138240
        %147 = vst.msk [vmem:[#allocation3] sm:$0xff] %vm146, 0.0
        %148 = vst.msk [vmem:[#allocation3 + $0x8] sm:$0xff] %vm146, 0.0
        %149 = vst.msk [vmem:[#allocation3 + $0x10] sm:$0xff] %vm146, 0.0
        %150 = vst.msk [vmem:[#allocation3 + $0x18] sm:$0xff] %vm146, 0.0
        %151 = vst.msk [vmem:[#allocation3 + $0x20] sm:$0xff] %vm146, 0.0
        loop: start=0, step=1, limit=4
        $region29: #{blur.1} parent=23 // loop_pre_header
          _
        $region30: #{blur.1} parent=23 // loop_header
          %s153 = sphi 0, %s157
          %p154 = scmp.ge.s32.totalorder %s153, 4
        $region31: #{blur.1} parent=23 // loop_header_branch
          %156 = sbr.rel (%p154) target = $region35
        $region32: #{blur.1} parent=23 // loop_body
          %s158 = smul.u32 %s153, 16
          %s159 = scalar_lea.vmem %s115, %s158 [#allocation4]
          %v160 = vld [vmem:[%s159] sm:$0xff]
          %v161 = vld [vmem:[%s159 + $0x8] sm:$0xff]
          %vm162 = vcmask 130048
          %163 = vst.msk [vmem:[#allocation2] sm:$0xff] %vm162, %v160
          %164 = vst.msk [vmem:[#allocation2 + $0x8] sm:$0xff] %vm162, %v161
          %v165 = vld [vmem:[#allocation2] sm:$0xff]
          %166 = vrot.lane.b32.xlu0 %v165, 2
          %v167 = vpop.permute.xlu0 %166
          %v168 = vmul.f32 %v167, 0.125
          %169 = vrot.lane.b32.xlu0 %v165, 1
          %v170 = vpop.permute.xlu0 %169
          %v171 = vmul.f32 %v170, 0.375
          %v172 = vadd.f32 %v168, %v171
          %v173 = vmul.f32 %v165, 0.375
          %v174 = vadd.f32 %v172, %v173
          %175 = vrot.lane.b32.xlu0 %v165, 127
          %v176 = vpop.permute.xlu0 %175
          %v177 = vmul.f32 %v176, 0.125
          %v178 = vadd.f32 %v174, %v177
          %179 = vst.msk [vmem:[#allocation3 + $0x8] sm:$0xff] %vm146, %v178
          %v180 = vld [vmem:[#allocation2 + $0x8] sm:$0xff]
          %181 = vrot.lane.b32.xlu0 %v180, 2
          %v182 = vpop.permute.xlu0 %181
          %v183 = vmul.f32 %v182, 0.125
          %184 = vrot.lane.b32.xlu0 %v180, 1
          %v185 = vpop.permute.xlu0 %184
          %v186 = vmul.f32 %v185, 0.375
          %v187 = vadd.f32 %v183, %v186
          %v188 = vmul.f32 %v180, 0.375
          %v189 = vadd.f32 %v187, %v188
          %190 = vrot.lane.b32.xlu0 %v180, 127
          %v191 = vpop.permute.xlu0 %190
          %v192 = vmul.f32 %v191, 0.125
          %v193 = vadd.f32 %v189, %v192
          %194 = vst.msk [vmem:[#allocation3 + $0x10] sm:$0xff] %vm146, %v193
          %v195 = vld [vmem:[#allocation3 + $0x6] sm:$0xff]
          %v196 = vmul.f32 %v195, 0.125
          %v197 = vld [vmem:[#allocation3 + $0x7] sm:$0xff]
          %v198 = vmul.f32 %v197, 0.375
          %v199 = vadd.f32 %v196, %v198
          %v200 = vld [vmem:[#allocation3 + $0x8] sm:$0xff]
          %v201 = vmul.f32 %v200, 0.375
          %v202 = vadd.f32 %v199, %v201
          %v203 = vld [vmem:[#allocation3 + $0x9] sm:$0xff]
          %v204 = vmul.f32 %v203, 0.125
          %v205 = vadd.f32 %v202, %v204
          %s206 = smul.u32 %s153, 24
          %s207 = scalar_lea.vmem %s142, %s206
          %208 = vst.msk [vmem:[%s207] sm:$0xff] %vm146, %v205
          %v209 = vld [vmem:[#allocation3 + $0xe] sm:$0xff]
          %v210 = vmul.f32 %v209, 0.125
          %v211 = vld [vmem:[#allocation3 + $0xf] sm:$0xff]
          %v212 = vmul.f32 %v211, 0.375
          %v213 = vadd.f32 %v210, %v212
          %v214 = vld [vmem:[#allocation3 + $0x10] sm:$0xff]
          %v215 = vmul.f32 %v214, 0.375
          %v216 = vadd.f32 %v213, %v215
          %v217 = vld [vmem:[#allocation3 + $0x11] sm:$0xff]
          %v218 = vmul.f32 %v217, 0.125
          %v219 = vadd.f32 %v216, %v218
          %220 = vst.msk [vmem:[%s207 + $0x8] sm:$0xff] %vm146, %v219
          %v221 = vld [vmem:[#allocation3 + $0x16] sm:$0xff]
          %v222 = vmul.f32 %v221, 0.125
          %v223 = vld [vmem:[#allocation3 + $0x17] sm:$0xff]
          %v224 = vmul.f32 %v223, 0.375
          %v225 = vadd.f32 %v222, %v224
          %v226 = vld [vmem:[#allocation3 + $0x18] sm:$0xff]
          %v227 = vmul.f32 %v226, 0.375
          %v228 = vadd.f32 %v225, %v227
          %v229 = vld [vmem:[#allocation3 + $0x19] sm:$0xff]
          %v230 = vmul.f32 %v229, 0.125
          %v231 = vadd.f32 %v228, %v230
          %vm232 = vcmask 131072
          %233 = vst.msk [vmem:[%s207 + $0x10] sm:$0x1] %vm232, %v231
        $region33: #{blur.1} parent=23 // loop_footer
          %s157 = sadd.s32 1, %s153
        $region34: #{blur.1} parent=23 // loop_footer_branch
          %152 = sbr.rel target = $region30
        $region35: #{blur.1} parent=23 // loop_exit
          _
        %s234 = smul.u32 4, %s15
        %p235 = scmp.lt.s32.totalorder %s234, 7
        %s236 = scalar_select %p235, %s234, 7
        %s237 = smul.addr %s236, 3
        %s238 = smul.addr %s237, 8
        %s239 = scalar_lea.vmem %s1, %s238
        // Predicated region
        $region36: #{blur.1} parent=23 // pred_check
          %p240 = pneg %p59
        $region37: #{blur.1} parent=23 // pred_check_branch
          %242 = sbr.rel (%p240) target = $region39
        $region38: #{blur.1} parent=23 // pred_region
          %s243 = smul.u32 4, %s15
        $region39: #{blur.1} parent=23 // pred_fallthru
          _
      $region24: #{blur.1} parent=5 // pred_fallthru
        _
      %p244 = scmp.le.s32.totalorder 2, %s10
      // Predicated region
      $region40: #{blur.1} parent=5 // pred_check
        %p245 = pneg %p244
      $region41: #{blur.1} parent=5 // pred_check_branch
        %247 = sbr.rel (%p245) target = $region43
      $region42: #{blur.1} parent=5 // pred_region
        %s248 = ssub.s32 %s10, 2
        // Predicated region
        $region44: #{blur.1} parent=42 // pred_check
          %p249 = pneg %p65
        $region45: #{blur.1} parent=42 // pred_check_branch
          %251 = sbr.rel (%p249) target = $region47
        $region46: #{blur.1} parent=42 // pred_region
          %s252 = smul.u32 4, %s16
          %p253 = scmp.lt.s32.totalorder %s252, 7
          %s254 = scalar_select %p253, %s252, 7
          %s255 = smul.addr %s254, 3
          %s256 = smul.addr %s255, 8
          %s257 = scalar_lea.vmem %s1, %s256
        $region47: #{blur.1} parent=42 // pred_fallthru
          _
      $region43: #{blur.1} parent=5 // pred_fallthru
        _
    $region6: #{blur.1} parent=1 // loop_footer
      %s14 = sadd.s32 1, %s10
    $region7: #{blur.1} parent=1 // loop_footer_branch
      %9 = sbr.rel target = $region3
    $region8: #{blur.1} parent=1 // loop_exit
      _
    %258 = vsyncpa [#allocation5], 1
    %s259 = scalar_lea.sflag [#allocation5], 1
    %260 = vsyncpa %s259, 1

</llo_original>
